<compile_context>
chip_gen: v7x
topology: tpu7x:2x2x1
jax: 0.10.0
libtpu: 0.0.40
codegen_flags: <defaults>
</compile_context>

<pallas_src>
import functools

import jax
import jax.numpy as jnp
from jax.experimental import pallas as pl
from jax.experimental.pallas import tpu as pltpu

_LANE = 128
_SUBLANE = 8
_COL_TILE = 512      # tile a layer's output-feature dim when wider than this
_TM_CAP = 4096       # absolute row-tile cap


def _round_up(x, m):
    return ((x + m - 1) // m) * m


def _lane_pad(n):
    return _round_up(max(int(n), 1), _LANE)


def _make_mlp_kernel(num_layers, compute_dtype, col_tile, has_scratch):
    """Kernel refs: (x, w1, b1, ..., wL, bL, out[, act_scratch])."""

    def kernel(*refs):
        x_ref = refs[0]
        param_refs = refs[1:1 + 2 * num_layers]
        o_ref = refs[1 + 2 * num_layers]
        act_ref = refs[2 + 2 * num_layers] if has_scratch else None

        def layer_piece(h_lo, w_ref, b_ref, c0, c1):
            # One column tile of h @ W + b with f32 accumulation (MXU).
            return (jnp.dot(h_lo, w_ref[:, c0:c1].astype(compute_dtype),
                            preferred_element_type=jnp.float32)
                    + b_ref[:, c0:c1].astype(jnp.float32))

        h = x_ref[...]                      # already compute_dtype (bf16)

        # Hidden layers: matmul + bias + ReLU (f32 epilogue).
        for i in range(num_layers - 1):
            w_ref = param_refs[2 * i]
            b_ref = param_refs[2 * i + 1]
            out_dim = w_ref.shape[1]
            h_lo = h.astype(compute_dtype)
            if out_dim > col_tile:
                # Column-tiled: store pieces into VMEM scratch to bound live
                # ranges (no jnp.concatenate of large vreg pieces).
                for c0 in range(0, out_dim, col_tile):
                    c1 = min(c0 + col_tile, out_dim)
                    act_ref[:, c0:c1] = jnp.maximum(
                        layer_piece(h_lo, w_ref, b_ref, c0, c1), 0.0)
                h = act_ref[:, :out_dim]
            else:
                h = jnp.maximum(layer_piece(h_lo, w_ref, b_ref, 0, out_dim), 0.0)

        # Last layer: matmul + bias, no activation; write straight to o_ref.
        w_ref = param_refs[2 * (num_layers - 1)]
        b_ref = param_refs[2 * (num_layers - 1) + 1]
        out_dim = w_ref.shape[1]
        h_lo = h.astype(compute_dtype)
        if out_dim > col_tile:
            for c0 in range(0, out_dim, col_tile):
                c1 = min(c0 + col_tile, out_dim)
                o_ref[:, c0:c1] = layer_piece(
                    h_lo, w_ref, b_ref, c0, c1).astype(o_ref.dtype)
        else:
            o_ref[...] = layer_piece(
                h_lo, w_ref, b_ref, 0, out_dim).astype(o_ref.dtype)

    return kernel


def _vmem_budget_and_cap():
    """(planning budget, vmem_limit_bytes ceiling) per TPU generation."""
    cap_bytes = 64 * 1024 * 1024
    try:
        info = pltpu.get_tpu_info()
        cap_bytes = int(getattr(info, "vmem_capacity_bytes", cap_bytes))
    except Exception:
        pass
    if cap_bytes >= 96 * 1024 * 1024:          # v5e / v6e: 128 MiB physical
        return 96 * 1024 * 1024, 110 * 1024 * 1024
    # v7x (64 MiB per TC) or unknown: leave headroom for Mosaic scratch.
    return 40 * 1024 * 1024, 48 * 1024 * 1024


def _choose_tile_m(n_rows, input_dim, output_dim, max_w, param_bytes,
                   x_itemsize, out_itemsize, vmem_budget):
    """Largest row tile fitting the budget; force >=2 grid steps when possible."""
    # Pallas double-buffers every input BlockSpec (even constant-index ones),
    # so resident params cost ~2x their byte size.
    avail = max(vmem_budget - 2 * param_bytes, 1 << 20)
    per_row = (2 * _lane_pad(input_dim) * x_itemsize       # x tile, 2 buffers
               + 2 * _lane_pad(output_dim) * out_itemsize  # out tile, 2 buffers
               + 2 * _lane_pad(max_w) * 4)                 # live f32 activations
    tm = min(_TM_CAP, max(_SUBLANE, int(avail // per_row)))
    tm = max(_SUBLANE, (tm // _SUBLANE) * _SUBLANE)
    rows8 = _round_up(max(n_rows, 1), _SUBLANE)
    if rows8 >= 2 * _SUBLANE:
        # >=2 grid steps so both v7x TensorCores get work on the "parallel" axis.
        tm = min(tm, max(_SUBLANE, ((rows8 // 2) // _SUBLANE) * _SUBLANE))
    return min(tm, rows8)


@functools.partial(jax.jit, static_argnames=("num_layers", "compute_dtype"))
def mlp_forward(x, params_flat, *, num_layers, compute_dtype=jnp.bfloat16):
    """params_flat = [w1, b1, ..., wL, bL] with wi:[in,out] (f32), bi:[1,out]."""
    input_dim = x.shape[-1]
    output_dim = params_flat[-2].shape[-1]
    lead_shape = x.shape[:-1]
    out_dtype = x.dtype

    # bf16 input stream: halves x DMA bytes; MXU consumes bf16 operands anyway.
    x2d = x.reshape(-1, input_dim).astype(compute_dtype)
    n_rows = x2d.shape[0]

    # Parameter prep: weights -> bf16, biases stay f32.  Hidden widths > 128
    # that are not lane multiples get zero-padded (semantic no-op: padded
    # features are 0, ReLU(0)=0, and the next layer's padded rows are 0).
    ws, bs, widths = [], [], [input_dim]
    prev_pad = 0
    for i in range(num_layers):
        w = params_flat[2 * i]
        b = params_flat[2 * i + 1]
        if prev_pad:
            w = jnp.pad(w, ((0, prev_pad), (0, 0)))
        cols = w.shape[1]
        prev_pad = 0
        if i < num_layers - 1 and cols > _LANE and cols % _LANE:
            new_cols = _round_up(cols, _LANE)
            w = jnp.pad(w, ((0, 0), (0, new_cols - cols)))
            b = jnp.pad(b, ((0, 0), (0, new_cols - cols)))
            prev_pad = new_cols - cols
            cols = new_cols
        ws.append(w.astype(compute_dtype))
        bs.append(b.astype(jnp.float32))
        widths.append(cols)

    x_itemsize = jnp.dtype(compute_dtype).itemsize
    out_itemsize = jnp.dtype(out_dtype).itemsize
    param_bytes = (sum(w.size * w.dtype.itemsize for w in ws)
                   + sum(b.size * b.dtype.itemsize for b in bs))
    max_w = max(widths)

    vmem_budget, vmem_cap = _vmem_budget_and_cap()
    tm = _choose_tile_m(n_rows, input_dim, output_dim, max_w, param_bytes,
                        x_itemsize, out_itemsize, vmem_budget)
    rows_padded = _round_up(max(n_rows, 1), tm)
    if rows_padded != n_rows:
        x2d = jnp.pad(x2d, ((0, rows_padded - n_rows), (0, 0)))
    grid = (rows_padded // tm,)

    flat_params = []
    for w, b in zip(ws, bs):
        flat_params.extend([w, b])

    in_specs = [pl.BlockSpec((tm, input_dim), lambda i: (i, 0))]
    for p in flat_params:
        # VMEM-resident across grid steps (constant block index).
        in_specs.append(pl.BlockSpec(p.shape, lambda i: (0, 0)))
    # Unpadded, full-width output block: last dim == full array dim, so HBM
    # writeback only carries the useful output_dim columns (contiguous range).
    out_spec = pl.BlockSpec((tm, output_dim), lambda i: (i, 0))

    hidden_widths = widths[1:num_layers]   # outputs of layers 0 .. L-2
    scratch_shapes = []
    scratch_bytes = 0
    has_scratch = any(hw > _COL_TILE for hw in hidden_widths)
    if has_scratch:
        sw = _lane_pad(max(hw for hw in hidden_widths if hw > _COL_TILE))
        scratch_shapes.append(pltpu.VMEM((tm, sw), jnp.float32))
        scratch_bytes = tm * sw * 4

    flops = 2 * n_rows * sum(w.shape[0] * w.shape[1] for w in ws)
    bytes_accessed = (rows_padded * input_dim * x_itemsize
                      + param_bytes
                      + rows_padded * output_dim * out_itemsize)
    cost = pl.CostEstimate(flops=flops, transcendentals=0,
                           bytes_accessed=bytes_accessed)

    vmem_est = (2 * param_bytes                                  # double-buffered params
                + 2 * tm * _lane_pad(input_dim) * x_itemsize     # x tiles
                + 2 * tm * _lane_pad(output_dim) * out_itemsize  # out tiles
                + 2 * tm * _lane_pad(max_w) * 4                  # f32 intermediates
                + scratch_bytes)
    vmem_limit = int(min(max(vmem_est + (8 << 20), 32 << 20), vmem_cap))

    kernel = _make_mlp_kernel(num_layers, compute_dtype, _COL_TILE, has_scratch)

    out2d = pl.pallas_call(
        kernel,
        out_shape=jax.ShapeDtypeStruct((rows_padded, output_dim), out_dtype),
        grid=grid,
        in_specs=in_specs,
        out_specs=out_spec,
        scratch_shapes=tuple(scratch_shapes),
        compiler_params=pltpu.CompilerParams(
            dimension_semantics=("parallel",),
            vmem_limit_bytes=vmem_limit),
        cost_estimate=cost,
    )(x2d, *flat_params)

    out2d = out2d[:n_rows]
    return out2d.reshape(*lead_shape, output_dim)


def init_mlp_params(key, input_dim, hidden_dim, output_dim, num_layers):
    """Init matching torch.nn.Linear defaults; W stored as [in, out], b as [1, out]."""
    h = [hidden_dim] * (num_layers - 1)
    dims_in = [input_dim] + h
    dims_out = h + [output_dim]

    params = []
    for n, k in zip(dims_in, dims_out):
        key, wk, bk = jax.random.split(key, 3)
        bound = 1.0 / jnp.sqrt(jnp.float32(n))
        w = jax.random.uniform(wk, (n, k), jnp.float32, -bound, bound)
        b = jax.random.uniform(bk, (1, k), jnp.float32, -bound, bound)
        params.extend([w, b])
    return params


def mlp_reference(x, params_flat, num_layers, compute_dtype=None):
    """Pure-JAX reference. If compute_dtype is set, emulate the kernel's bf16 dots."""
    lead_shape = x.shape[:-1]
    h = x.reshape(-1, x.shape[-1]).astype(jnp.float32)
    for i in range(num_layers):
        w = params_flat[2 * i]
        b = params_flat[2 * i + 1].astype(jnp.float32)
        if compute_dtype is not None:
            h = jnp.dot(h.astype(compute_dtype), w.astype(compute_dtype),
                        preferred_element_type=jnp.float32) + b
        else:
            h = h @ w + b
        if i < num_layers - 1:
            h = jnp.maximum(h, 0.0)
    return h.reshape(*lead_shape, -1).astype(x.dtype)


if __name__ == "__main__":
    # Small shapes consistent with the module's forward:
    #   x: [batch=2, seq=8, input_dim=32], hidden_dim=64, output_dim=16, 3 layers.
    input_dim, hidden_dim, output_dim, num_layers = 32, 64, 16, 3

    key = jax.random.PRNGKey(0)
    key, xk = jax.random.split(key)
    x = jax.random.normal(xk, (2, 8, input_dim), jnp.float32)

    params = init_mlp_params(key, input_dim, hidden_dim, output_dim, num_layers)

    out = mlp_forward(x, params, num_layers=num_layers)
    out = jax.block_until_ready(out)
    assert out.shape == (2, 8, output_dim), out.shape

    # Tight check vs a reference that emulates the kernel's bf16 MXU operands.
    ref_bf16 = mlp_reference(x, params, num_layers, compute_dtype=jnp.bfloat16)
    assert jnp.allclose(out, ref_bf16, atol=2e-3, rtol=2e-3), \
        "mismatch vs bf16-emulating reference"

    # Loose check vs the exact f32 module semantics (bf16 rounding tolerance).
    ref_f32 = mlp_reference(x, params, num_layers)
    assert jnp.allclose(out, ref_f32, atol=5e-2, rtol=5e-2), \
        "mismatch vs f32 reference"

    print("KERNEL_OK")
</pallas_src>

<mosaic_0001>
module attributes {stable_mosaic.version = 11 : i64} {
  func.func @kernel(%arg0: i32, %arg1: memref<8x32xbf16, #tpu.memory_space<vmem>>, %arg2: memref<32x64xbf16, #tpu.memory_space<vmem>>, %arg3: memref<1x64xf32, #tpu.memory_space<vmem>>, %arg4: memref<64x64xbf16, #tpu.memory_space<vmem>>, %arg5: memref<1x64xf32, #tpu.memory_space<vmem>>, %arg6: memref<64x16xbf16, #tpu.memory_space<vmem>>, %arg7: memref<1x16xf32, #tpu.memory_space<vmem>>, %arg8: memref<8x16xf32, #tpu.memory_space<vmem>>) attributes {dimension_semantics = [#tpu.dimension_semantics<parallel>], iteration_bounds = array<i64: 2>, scalar_prefetch = 0 : i64, scratch_operands = 0 : i64, tpu.core_type = #tpu.core_type<tc>, window_params = [{transform_indices = @transform_0, window_bounds = array<i64: 8, 32>}, {pipeline_mode = #tpu.pipeline_mode<synchronous>, transform_indices = @transform_1, window_bounds = array<i64: 32, 64>}, {pipeline_mode = #tpu.pipeline_mode<synchronous>, transform_indices = @transform_2, window_bounds = array<i64: 1, 64>}, {pipeline_mode = #tpu.pipeline_mode<synchronous>, transform_indices = @transform_3, window_bounds = array<i64: 64, 64>}, {pipeline_mode = #tpu.pipeline_mode<synchronous>, transform_indices = @transform_4, window_bounds = array<i64: 1, 64>}, {pipeline_mode = #tpu.pipeline_mode<synchronous>, transform_indices = @transform_5, window_bounds = array<i64: 64, 16>}, {pipeline_mode = #tpu.pipeline_mode<synchronous>, transform_indices = @transform_6, window_bounds = array<i64: 1, 16>}, {transform_indices = @transform_7, window_bounds = array<i64: 8, 16>}]} {
    %c0 = arith.constant 0 : index
    %c0_0 = arith.constant 0 : index
    %0 = vector.load %arg1[%c0, %c0_0] : memref<8x32xbf16, #tpu.memory_space<vmem>>, vector<8x32xbf16>
    %c0_1 = arith.constant 0 : index
    %c0_2 = arith.constant 0 : index
    %1 = vector.load %arg2[%c0_1, %c0_2] : memref<32x64xbf16, #tpu.memory_space<vmem>>, vector<32x64xbf16>
    %cst = arith.constant dense<0.000000e+00> : vector<8x64xf32>
    %2 = tpu.matmul %0, %1, %cst {dimension_numbers = #tpu.dot_dimension_numbers<[1], [0], [0], [1], [0, 0, 1, 1], [], []>} : vector<8x32xbf16>, vector<32x64xbf16>, vector<8x64xf32> -> vector<8x64xf32>
    %c0_3 = arith.constant 0 : index
    %c0_4 = arith.constant 0 : index
    %3 = vector.load %arg3[%c0_3, %c0_4] : memref<1x64xf32, #tpu.memory_space<vmem>>, vector<1x64xf32>
    %4 = vector.broadcast %3 : vector<1x64xf32> to vector<8x64xf32>
    %5 = arith.addf %2, %4 : vector<8x64xf32>
    %cst_5 = arith.constant 0.000000e+00 : f32
    %6 = vector.broadcast %cst_5 : f32 to vector<8x64xf32>
    %7 = arith.maximumf %5, %6 : vector<8x64xf32>
    %8 = arith.truncf %7 : vector<8x64xf32> to vector<8x64xbf16>
    %c0_6 = arith.constant 0 : index
    %c0_7 = arith.constant 0 : index
    %9 = vector.load %arg4[%c0_6, %c0_7] : memref<64x64xbf16, #tpu.memory_space<vmem>>, vector<64x64xbf16>
    %cst_8 = arith.constant dense<0.000000e+00> : vector<8x64xf32>
    %10 = tpu.matmul %8, %9, %cst_8 {dimension_numbers = #tpu.dot_dimension_numbers<[1], [0], [0], [1], [0, 0, 1, 1], [], []>} : vector<8x64xbf16>, vector<64x64xbf16>, vector<8x64xf32> -> vector<8x64xf32>
    %c0_9 = arith.constant 0 : index
    %c0_10 = arith.constant 0 : index
    %11 = vector.load %arg5[%c0_9, %c0_10] : memref<1x64xf32, #tpu.memory_space<vmem>>, vector<1x64xf32>
    %12 = vector.broadcast %11 : vector<1x64xf32> to vector<8x64xf32>
    %13 = arith.addf %10, %12 : vector<8x64xf32>
    %cst_11 = arith.constant 0.000000e+00 : f32
    %14 = vector.broadcast %cst_11 : f32 to vector<8x64xf32>
    %15 = arith.maximumf %13, %14 : vector<8x64xf32>
    %16 = arith.truncf %15 : vector<8x64xf32> to vector<8x64xbf16>
    %c0_12 = arith.constant 0 : index
    %c0_13 = arith.constant 0 : index
    %17 = vector.load %arg6[%c0_12, %c0_13] : memref<64x16xbf16, #tpu.memory_space<vmem>>, vector<64x16xbf16>
    %cst_14 = arith.constant dense<0.000000e+00> : vector<8x16xf32>
    %18 = tpu.matmul %16, %17, %cst_14 {dimension_numbers = #tpu.dot_dimension_numbers<[1], [0], [0], [1], [0, 0, 1, 1], [], []>} : vector<8x64xbf16>, vector<64x16xbf16>, vector<8x16xf32> -> vector<8x16xf32>
    %c0_15 = arith.constant 0 : index
    %c0_16 = arith.constant 0 : index
    %19 = vector.load %arg7[%c0_15, %c0_16] : memref<1x16xf32, #tpu.memory_space<vmem>>, vector<1x16xf32>
    %20 = vector.broadcast %19 : vector<1x16xf32> to vector<8x16xf32>
    %21 = arith.addf %18, %20 : vector<8x16xf32>
    %c0_17 = arith.constant 0 : index
    %c0_18 = arith.constant 0 : index
    %22 = vector.load %arg8[%c0_17, %c0_18] : memref<8x16xf32, #tpu.memory_space<vmem>>, vector<8x16xf32>
    tpu.vector_store %arg8[%c0_17, %c0_18], %21 {strides = array<i32>} : memref<8x16xf32, #tpu.memory_space<vmem>>, vector<8x16xf32>,
    return
  }
  func.func @transform_0(%arg0: i32) -> (i32, i32) {
    %c0_i32 = arith.constant 0 : i32
    %c0_i32_0 = arith.constant 0 : i32
    return %arg0, %c0_i32 : i32, i32
  }
  func.func @transform_1(%arg0: i32) -> (i32, i32) {
    %c0_i32 = arith.constant 0 : i32
    %c0_i32_0 = arith.constant 0 : i32
    %c0_i32_1 = arith.constant 0 : i32
    return %c0_i32, %c0_i32_0 : i32, i32
  }
  func.func @transform_2(%arg0: i32) -> (i32, i32) {
    %c0_i32 = arith.constant 0 : i32
    %c0_i32_0 = arith.constant 0 : i32
    %c0_i32_1 = arith.constant 0 : i32
    return %c0_i32, %c0_i32_0 : i32, i32
  }
  func.func @transform_3(%arg0: i32) -> (i32, i32) {
    %c0_i32 = arith.constant 0 : i32
    %c0_i32_0 = arith.constant 0 : i32
    %c0_i32_1 = arith.constant 0 : i32
    return %c0_i32, %c0_i32_0 : i32, i32
  }
  func.func @transform_4(%arg0: i32) -> (i32, i32) {
    %c0_i32 = arith.constant 0 : i32
    %c0_i32_0 = arith.constant 0 : i32
    %c0_i32_1 = arith.constant 0 : i32
    return %c0_i32, %c0_i32_0 : i32, i32
  }
  func.func @transform_5(%arg0: i32) -> (i32, i32) {
    %c0_i32 = arith.constant 0 : i32
    %c0_i32_0 = arith.constant 0 : i32
    %c0_i32_1 = arith.constant 0 : i32
    return %c0_i32, %c0_i32_0 : i32, i32
  }
  func.func @transform_6(%arg0: i32) -> (i32, i32) {
    %c0_i32 = arith.constant 0 : i32
    %c0_i32_0 = arith.constant 0 : i32
    %c0_i32_1 = arith.constant 0 : i32
    return %c0_i32, %c0_i32_0 : i32, i32
  }
  func.func @transform_7(%arg0: i32) -> (i32, i32) {
    %c0_i32 = arith.constant 0 : i32
    %c0_i32_0 = arith.constant 0 : i32
    return %arg0, %c0_i32 : i32, i32
  }
}

</mosaic_0001>

<llo_original>
// kernel: mlp_forward.1
$region0: #{mlp_forward.1}
  #allocation0 [shape = 'u32[]', space=smem, size = 0x4, offset = 0x4, fixed_abs, tag = 'smem constant byte address 0x4 - core index']
  #allocation1 [shape = 'u32[144,128]{1,0:T(1,128)}', space=vmem, size = 0x12000, scoped, tag = 'internal scratch']
  %s0 = inlined_call_operand.vmem [shape: bf16[16,32], index: 0, kind: input, shape index: {}]
  %s1 = inlined_call_operand.vmem [shape: bf16[32,64], index: 1, kind: input, shape index: {}]
  %s2 = inlined_call_operand.vmem [shape: f32[1,64], index: 2, kind: input, shape index: {}]
  %s3 = inlined_call_operand.vmem [shape: bf16[64,64], index: 3, kind: input, shape index: {}]
  %s4 = inlined_call_operand.vmem [shape: f32[1,64], index: 4, kind: input, shape index: {}]
  %s5 = inlined_call_operand.vmem [shape: bf16[64,16], index: 5, kind: input, shape index: {}]
  %s6 = inlined_call_operand.vmem [shape: f32[1,16], index: 6, kind: input, shape index: {}]
  %s7 = inlined_call_operand.hbm [shape: f32[16,16], index: 7, kind: output, shape index: {}]
  %s8 = sld [smem:[#allocation0]]
  $region61: #{mlp_forward.1} parent=0
    _
  %s10 = ssub.s32 1, %s8
  %s11 = scalar_select 0, %s10, %s8
  $region1: #{mlp_forward.1} parent=0
    #allocation2 [shape = 'u8[8192]{0}', space=vmem, size = 0x2000, scoped, tag = 'output window, operand 0']
    #allocation3 [shape = 's32[2]{0}', space=sflag, size = 0x8, scoped, tag = 'scoped memory for mlp_forward.1']
    %12 = vsyncpa [#allocation3], 0
    %s13 = scalar_lea.sflag [#allocation3], 1
    %14 = vsyncpa %s13, 0
    loop: start=0, step=1, limit=4
    $region2: #{mlp_forward.1} parent=1 // loop_pre_header
      _
    $region3: #{mlp_forward.1} parent=1 // loop_header
      %s16 = sphi 0, %s20
      %p17 = scmp.ge.s32.totalorder %s16, 4
      %s26 = sphi 0, %s28
      %s29 = sphi 0, %s26
      %s30 = sphi 0, %s29
      %s46 = sphi 0, %s30
      %s50 = sphi 0, %s50
      %s52 = sphi 0, %s50
      %s53 = sphi 0, %s52
      %s67 = sphi 0, %s53
      %s71 = sphi 0, %s71
      %s73 = sphi 0, %s71
      %s74 = sphi 0, %s73
      %s88 = sphi 0, %s74
      %s92 = sphi 0, %s92
      %s94 = sphi 0, %s92
      %s95 = sphi 0, %s94
      %s109 = sphi 0, %s95
      %s113 = sphi 0, %s113
      %s115 = sphi 0, %s113
      %s116 = sphi 0, %s115
      %s130 = sphi 0, %s116
      %s134 = sphi 0, %s134
      %s136 = sphi 0, %s134
      %s137 = sphi 0, %s136
      %s151 = sphi 0, %s137
      %s155 = sphi 0, %s155
      %s157 = sphi 0, %s155
      %s158 = sphi 0, %s157
      %s172 = sphi 0, %s158
      %s178 = sphi 0, %s180
      %s181 = sphi 0, %s178
      %s182 = sphi 0, %s181
      %s198 = sphi 0, %s182
    $region4: #{mlp_forward.1} parent=1 // loop_header_branch
      %19 = sbr.rel (%p17) target = $region8
    $region5: #{mlp_forward.1} parent=1 // loop_body
      %s21 = ssub.s32 %s16, 1
      %s22 = ssub.s32 %s16, 2
      %s23 = sadd.s32 %s16, 1
      %s24 = ssub.s32 %s16, %s23
      %p25 = scmp.eq.s32.totalorder %s24, 0
      %s27 = sadd.s32 %s26, 1
      %s28 = scalar_select %p25, %s26, %s27
      %p31 = pneg %p25
      %p32 = scmp.eq.s32.totalorder %s16, 1
      %p33 = por %p31, %p32
      %p34 = scmp.ne.s32.totalorder %s26, %s29
      %p35 = scmp.eq.s32.totalorder %s16, 0
      %p36 = por %p34, %p35
      %p37 = scmp.ne.s32.totalorder %s26, %s29
      %p38 = scmp.eq.s32.totalorder %s21, 1
      %p39 = por %p37, %p38
      %p40 = scmp.ne.s32.totalorder %s29, %s30
      %p41 = scmp.eq.s32.totalorder %s21, 0
      %p42 = por %p40, %p41
      %p43 = scmp.ne.s32.totalorder %s29, %s30
      %p44 = scmp.eq.s32.totalorder %s22, 1
      %p45 = por %p43, %p44
      %p47 = scmp.ne.s32.totalorder %s30, %s46
      %p48 = scmp.eq.s32.totalorder %s22, 0
      %p49 = por %p47, %p48
      %s51 = sadd.s32 %s50, 1
      %p54 = scmp.eq.s32.totalorder %s16, 1
      %p55 = scmp.ne.s32.totalorder %s50, %s52
      %p56 = scmp.eq.s32.totalorder %s16, 0
      %p57 = por %p55, %p56
      %p58 = scmp.ne.s32.totalorder %s50, %s52
      %p59 = scmp.eq.s32.totalorder %s21, 1
      %p60 = por %p58, %p59
      %p61 = scmp.ne.s32.totalorder %s52, %s53
      %p62 = scmp.eq.s32.totalorder %s21, 0
      %p63 = por %p61, %p62
      %p64 = scmp.ne.s32.totalorder %s52, %s53
      %p65 = scmp.eq.s32.totalorder %s22, 1
      %p66 = por %p64, %p65
      %p68 = scmp.ne.s32.totalorder %s53, %s67
      %p69 = scmp.eq.s32.totalorder %s22, 0
      %p70 = por %p68, %p69
      %s72 = sadd.s32 %s71, 1
      %p75 = scmp.eq.s32.totalorder %s16, 1
      %p76 = scmp.ne.s32.totalorder %s71, %s73
      %p77 = scmp.eq.s32.totalorder %s16, 0
      %p78 = por %p76, %p77
      %p79 = scmp.ne.s32.totalorder %s71, %s73
      %p80 = scmp.eq.s32.totalorder %s21, 1
      %p81 = por %p79, %p80
      %p82 = scmp.ne.s32.totalorder %s73, %s74
      %p83 = scmp.eq.s32.totalorder %s21, 0
      %p84 = por %p82, %p83
      %p85 = scmp.ne.s32.totalorder %s73, %s74
      %p86 = scmp.eq.s32.totalorder %s22, 1
      %p87 = por %p85, %p86
      %p89 = scmp.ne.s32.totalorder %s74, %s88
      %p90 = scmp.eq.s32.totalorder %s22, 0
      %p91 = por %p89, %p90
      %s93 = sadd.s32 %s92, 1
      %p96 = scmp.eq.s32.totalorder %s16, 1
      %p97 = scmp.ne.s32.totalorder %s92, %s94
      %p98 = scmp.eq.s32.totalorder %s16, 0
      %p99 = por %p97, %p98
      %p100 = scmp.ne.s32.totalorder %s92, %s94
      %p101 = scmp.eq.s32.totalorder %s21, 1
      %p102 = por %p100, %p101
      %p103 = scmp.ne.s32.totalorder %s94, %s95
      %p104 = scmp.eq.s32.totalorder %s21, 0
      %p105 = por %p103, %p104
      %p106 = scmp.ne.s32.totalorder %s94, %s95
      %p107 = scmp.eq.s32.totalorder %s22, 1
      %p108 = por %p106, %p107
      %p110 = scmp.ne.s32.totalorder %s95, %s109
      %p111 = scmp.eq.s32.totalorder %s22, 0
      %p112 = por %p110, %p111
      %s114 = sadd.s32 %s113, 1
      %p117 = scmp.eq.s32.totalorder %s16, 1
      %p118 = scmp.ne.s32.totalorder %s113, %s115
      %p119 = scmp.eq.s32.totalorder %s16, 0
      %p120 = por %p118, %p119
      %p121 = scmp.ne.s32.totalorder %s113, %s115
      %p122 = scmp.eq.s32.totalorder %s21, 1
      %p123 = por %p121, %p122
      %p124 = scmp.ne.s32.totalorder %s115, %s116
      %p125 = scmp.eq.s32.totalorder %s21, 0
      %p126 = por %p124, %p125
      %p127 = scmp.ne.s32.totalorder %s115, %s116
      %p128 = scmp.eq.s32.totalorder %s22, 1
      %p129 = por %p127, %p128
      %p131 = scmp.ne.s32.totalorder %s116, %s130
      %p132 = scmp.eq.s32.totalorder %s22, 0
      %p133 = por %p131, %p132
      %s135 = sadd.s32 %s134, 1
      %p138 = scmp.eq.s32.totalorder %s16, 1
      %p139 = scmp.ne.s32.totalorder %s134, %s136
      %p140 = scmp.eq.s32.totalorder %s16, 0
      %p141 = por %p139, %p140
      %p142 = scmp.ne.s32.totalorder %s134, %s136
      %p143 = scmp.eq.s32.totalorder %s21, 1
      %p144 = por %p142, %p143
      %p145 = scmp.ne.s32.totalorder %s136, %s137
      %p146 = scmp.eq.s32.totalorder %s21, 0
      %p147 = por %p145, %p146
      %p148 = scmp.ne.s32.totalorder %s136, %s137
      %p149 = scmp.eq.s32.totalorder %s22, 1
      %p150 = por %p148, %p149
      %p152 = scmp.ne.s32.totalorder %s137, %s151
      %p153 = scmp.eq.s32.totalorder %s22, 0
      %p154 = por %p152, %p153
      %s156 = sadd.s32 %s155, 1
      %p159 = scmp.eq.s32.totalorder %s16, 1
      %p160 = scmp.ne.s32.totalorder %s155, %s157
      %p161 = scmp.eq.s32.totalorder %s16, 0
      %p162 = por %p160, %p161
      %p163 = scmp.ne.s32.totalorder %s155, %s157
      %p164 = scmp.eq.s32.totalorder %s21, 1
      %p165 = por %p163, %p164
      %p166 = scmp.ne.s32.totalorder %s157, %s158
      %p167 = scmp.eq.s32.totalorder %s21, 0
      %p168 = por %p166, %p167
      %p169 = scmp.ne.s32.totalorder %s157, %s158
      %p170 = scmp.eq.s32.totalorder %s22, 1
      %p171 = por %p169, %p170
      %p173 = scmp.ne.s32.totalorder %s158, %s172
      %p174 = scmp.eq.s32.totalorder %s22, 0
      %p175 = por %p173, %p174
      %s176 = ssub.s32 %s16, %s23
      %p177 = scmp.eq.s32.totalorder %s176, 0
      %s179 = sadd.s32 %s178, 1
      %s180 = scalar_select %p177, %s178, %s179
      %p183 = pneg %p177
      %p184 = scmp.eq.s32.totalorder %s16, 1
      %p185 = por %p183, %p184
      %p186 = scmp.ne.s32.totalorder %s178, %s181
      %p187 = scmp.eq.s32.totalorder %s16, 0
      %p188 = por %p186, %p187
      %p189 = scmp.ne.s32.totalorder %s178, %s181
      %p190 = scmp.eq.s32.totalorder %s21, 1
      %p191 = por %p189, %p190
      %p192 = scmp.ne.s32.totalorder %s181, %s182
      %p193 = scmp.eq.s32.totalorder %s21, 0
      %p194 = por %p192, %p193
      %p195 = scmp.ne.s32.totalorder %s181, %s182
      %p196 = scmp.eq.s32.totalorder %s22, 1
      %p197 = por %p195, %p196
      %p199 = scmp.ne.s32.totalorder %s182, %s198
      %p200 = scmp.eq.s32.totalorder %s22, 0
      %p201 = por %p199, %p200
      %p202 = scmp.le.s32.totalorder 1, %s16
      %p203 = scmp.lt.s32.totalorder %s16, 3
      %p204 = pnand %p202, %p203
      %p205 = pneg %p204
      // Predicated region
      $region9: #{mlp_forward.1} parent=5 // pred_check
        _
      $region10: #{mlp_forward.1} parent=5 // pred_check_branch
        %207 = sbr.rel (%p204) target = $region12
      $region11: #{mlp_forward.1} parent=5 // pred_region
        %s208 = ssub.s32 %s16, 1
        // Predicated region
        $region13: #{mlp_forward.1} parent=11 // pred_check
          %p209 = pneg %p63
        $region14: #{mlp_forward.1} parent=11 // pred_check_branch
          %211 = sbr.rel (%p209) target = $region16
        $region15: #{mlp_forward.1} parent=11 // pred_region
          _
        $region16: #{mlp_forward.1} parent=11 // pred_fallthru
          _
        // Predicated region
        $region17: #{mlp_forward.1} parent=11 // pred_check
          %p212 = pneg %p84
        $region18: #{mlp_forward.1} parent=11 // pred_check_branch
          %214 = sbr.rel (%p212) target = $region20
        $region19: #{mlp_forward.1} parent=11 // pred_region
          _
        $region20: #{mlp_forward.1} parent=11 // pred_fallthru
          _
        // Predicated region
        $region21: #{mlp_forward.1} parent=11 // pred_check
          %p215 = pneg %p105
        $region22: #{mlp_forward.1} parent=11 // pred_check_branch
          %217 = sbr.rel (%p215) target = $region24
        $region23: #{mlp_forward.1} parent=11 // pred_region
          _
        $region24: #{mlp_forward.1} parent=11 // pred_fallthru
          _
        // Predicated region
        $region25: #{mlp_forward.1} parent=11 // pred_check
          %p218 = pneg %p126
        $region26: #{mlp_forward.1} parent=11 // pred_check_branch
          %220 = sbr.rel (%p218) target = $region28
        $region27: #{mlp_forward.1} parent=11 // pred_region
          _
        $region28: #{mlp_forward.1} parent=11 // pred_fallthru
          _
        // Predicated region
        $region29: #{mlp_forward.1} parent=11 // pred_check
          %p221 = pneg %p147
        $region30: #{mlp_forward.1} parent=11 // pred_check_branch
          %223 = sbr.rel (%p221) target = $region32
        $region31: #{mlp_forward.1} parent=11 // pred_region
          _
        $region32: #{mlp_forward.1} parent=11 // pred_fallthru
          _
        // Predicated region
        $region33: #{mlp_forward.1} parent=11 // pred_check
          %p224 = pneg %p168
        $region34: #{mlp_forward.1} parent=11 // pred_check_branch
          %226 = sbr.rel (%p224) target = $region36
        $region35: #{mlp_forward.1} parent=11 // pred_region
          _
        $region36: #{mlp_forward.1} parent=11 // pred_fallthru
          _
      $region12: #{mlp_forward.1} parent=5 // pred_fallthru
        _
      %p227 = scmp.lt.s32.totalorder %s16, 2
      // Predicated region
      $region37: #{mlp_forward.1} parent=5 // pred_check
        %p228 = pneg %p227
      $region38: #{mlp_forward.1} parent=5 // pred_check_branch
        %230 = sbr.rel (%p228) target = $region40
      $region39: #{mlp_forward.1} parent=5 // pred_region
        // Predicated region
        $region41: #{mlp_forward.1} parent=39 // pred_check
          %p231 = pneg %p36
        $region42: #{mlp_forward.1} parent=39 // pred_check_branch
          %233 = sbr.rel (%p231) target = $region44
        $region43: #{mlp_forward.1} parent=39 // pred_region
          %p234 = scmp.lt.s32.totalorder %s16, 1
          %s235 = scalar_select %p234, %s16, 1
          %s236 = smul.addr %s235, 4
          %s237 = scalar_lea.vmem %s0, %s236
        $region44: #{mlp_forward.1} parent=39 // pred_fallthru
          _
      $region40: #{mlp_forward.1} parent=5 // pred_fallthru
        _
      %p238 = scmp.le.s32.totalorder 1, %s16
      %p239 = scmp.lt.s32.totalorder %s16, 3
      %p240 = pnand %p238, %p239
      %p241 = pneg %p240
      // Predicated region
      $region45: #{mlp_forward.1} parent=5 // pred_check
        _
      $region46: #{mlp_forward.1} parent=5 // pred_check_branch
        %243 = sbr.rel (%p240) target = $region48
      $region47: #{mlp_forward.1} parent=5 // pred_region
        %s244 = ssub.s32 %s16, 1
        %p245 = scmp.lt.s32.totalorder %s21, 1
        %s246 = scalar_select %p245, %s21, 1
        %s247 = smul.addr %s246, 4
        %s248 = scalar_lea.vmem %s0, %s247
        %p249 = pneg %p42
        %p250 = pneg %p39
        %p251 = pneg %p63
        %p252 = pneg %p60
        %p253 = pneg %p84
        %p254 = pneg %p81
        %p255 = pneg %p105
        %p256 = pneg %p102
        %p257 = pneg %p126
        %p258 = pneg %p123
        %p259 = pneg %p147
        %p260 = pneg %p144
        %p261 = pneg %p168
        %p262 = pneg %p165
        %p263 = pneg %p194
        %p264 = pneg %p191
        %s265 = sand.u32 %s181, 1
        %s266 = scalar_lea.sflag [#allocation3], %s265
        %s267 = sand.u32 %s181, 1
        %s268 = smul.addr %s267, 8
        %s269 = scalar_lea.vmem [#allocation2], %s268
        %p270 = scmp.lt.s32.totalorder %s21, 1
        %s271 = scalar_select %p270, %s21, 1
        %s272 = smul.addr %s271, 4
        %s273 = scalar_lea.vmem %s0, %s272
        %v275 = vld [vmem:[%s273] sm:$0xf]
        %v276 = vld [vmem:[%s1] sm:$0xf]
        %v277 = vld [vmem:[%s1 + $0x4] sm:$0xf]
        %v278 = vld [vmem:[%s1 + $0x8] sm:$0xf]
        %v279 = vld [vmem:[%s1 + $0xc] sm:$0xf]
        %v280 = vld [vmem:[%s2] sm:$0x1]
        %v282 = vlaneseq
        %v283 = vshrl.u32 %v282, 7
        %v284 = vsub.s32 0, %v283
        %v285 = vrot.slane %v280, %v284
        %v291 = vunpack.c.l.b16 %v276
        %v292 = vunpack.c.l.b16 %v277
        %v293 = vunpack.c.l.b16 %v278
        %v294 = vunpack.c.l.b16 %v279
        %v295 = vpack.c.b16 %v292, %v291
        %v296 = vpack.c.b16 %v294, %v293
        %vm299 = vcmask 261120
        %v301 = vsel %vm299, %v275, 0
        %303 = vmatprep.subr.bf16.mxu0 0
        %304 = vmatpush1.bf16.msra.mxu0 %v295
        %305 = vmatprep.subr.bf16.mxu0 0
        %306 = vmatpush1.bf16.msra.mxu0 %v296
        %307 = vmatprep.subr.bf16.mxu0 0
        %308 = vmatpush1.bf16.msra.mxu0 0
        %309 = vmatprep.subr.bf16.mxu0 0
        %310 = vmatpush1.bf16.msra.mxu0 0
        %311 = vmatprep.subr.bf16.mxu0 0
        %312 = vmatpush1.bf16.msra.mxu0 0
        %313 = vmatprep.subr.bf16.mxu0 0
        %314 = vmatpush1.bf16.msra.mxu0 0
        %315 = vmatprep.subr.bf16.mxu0 0
        %316 = vmatpush1.bf16.msra.mxu0 0
        %317 = vmatprep.subr.bf16.mxu0 0
        %318 = vmatpush1.bf16.msra.mxu0 0
        %319 = vmatprep.subr.bf16.mxu0 0
        %320 = vmatpush1.bf16.msra.mxu0 0
        %321 = vmatprep.subr.bf16.mxu0 0
        %322 = vmatpush1.bf16.msra.mxu0 0
        %323 = vmatprep.subr.bf16.mxu0 0
        %324 = vmatpush1.bf16.msra.mxu0 0
        %325 = vmatprep.subr.bf16.mxu0 0
        %326 = vmatpush1.bf16.msra.mxu0 0
        %327 = vmatprep.subr.bf16.mxu0 0
        %328 = vmatpush1.bf16.msra.mxu0 0
        %329 = vmatprep.subr.bf16.mxu0 0
        %330 = vmatpush1.bf16.msra.mxu0 0
        %331 = vmatprep.subr.bf16.mxu0 0
        %332 = vmatpush1.bf16.msra.mxu0 0
        %333 = vmatprep.subr.bf16.mxu0 0
        %334 = vmatpush1.bf16.msra.mxu0 0
        %335 = vmatprep.mubr.bf16.mxu0 0
        %336 = vmatmul.mubr.bf16.gmra.mrb[0].mxu0 %v301
        %v337 = vpop.f32.mrb[0].mxu0
        %v338 = vadd.f32 %v285, %v337
        %v339 = vpop.f32.mrb[0].mxu0
        %v340 = vpop.f32.mrb[0].mxu0
        %v341 = vpop.f32.mrb[0].mxu0
        %342 = vdwg.mxu0
        %v343 = vmax.f32 %v338, 0.0
        %v344 = vpack.c.bf16 %v343, %v343
        %v345 = vld [vmem:[%s3] sm:$0xf]
        %v346 = vld [vmem:[%s3 + $0x4] sm:$0xf]
        %v347 = vld [vmem:[%s3 + $0x8] sm:$0xf]
        %v348 = vld [vmem:[%s3 + $0xc] sm:$0xf]
        %v349 = vld [vmem:[%s3 + $0x10] sm:$0xf]
        %v350 = vld [vmem:[%s3 + $0x14] sm:$0xf]
        %v351 = vld [vmem:[%s3 + $0x18] sm:$0xf]
        %v352 = vld [vmem:[%s3 + $0x1c] sm:$0xf]
        %v353 = vld [vmem:[%s4] sm:$0x1]
        %v355 = vlaneseq
        %v356 = vshrl.u32 %v355, 7
        %v357 = vsub.s32 0, %v356
        %v358 = vrot.slane %v353, %v357
        %v368 = vunpack.c.l.b16 %v345
        %v369 = vunpack.c.l.b16 %v346
        %v370 = vunpack.c.l.b16 %v347
        %v371 = vunpack.c.l.b16 %v348
        %v372 = vunpack.c.l.b16 %v349
        %v373 = vunpack.c.l.b16 %v350
        %v374 = vunpack.c.l.b16 %v351
        %v375 = vunpack.c.l.b16 %v352
        %v376 = vpack.c.b16 %v369, %v368
        %v377 = vpack.c.b16 %v371, %v370
        %v378 = vpack.c.b16 %v373, %v372
        %v379 = vpack.c.b16 %v375, %v374
        %vm384 = vcmask 523264
        %v386 = vsel %vm384, %v344, 0
        %388 = vmatprep.subr.bf16.mxu0 0
        %389 = vmatpush1.bf16.msra.mxu0 %v376
        %390 = vmatprep.subr.bf16.mxu0 0
        %391 = vmatpush1.bf16.msra.mxu0 %v377
        %392 = vmatprep.subr.bf16.mxu0 0
        %393 = vmatpush1.bf16.msra.mxu0 %v378
        %394 = vmatprep.subr.bf16.mxu0 0
        %395 = vmatpush1.bf16.msra.mxu0 %v379
        %396 = vmatprep.subr.bf16.mxu0 0
        %397 = vmatpush1.bf16.msra.mxu0 0
        %398 = vmatprep.subr.bf16.mxu0 0
        %399 = vmatpush1.bf16.msra.mxu0 0
        %400 = vmatprep.subr.bf16.mxu0 0
        %401 = vmatpush1.bf16.msra.mxu0 0
        %402 = vmatprep.subr.bf16.mxu0 0
        %403 = vmatpush1.bf16.msra.mxu0 0
        %404 = vmatprep.subr.bf16.mxu0 0
        %405 = vmatpush1.bf16.msra.mxu0 0
        %406 = vmatprep.subr.bf16.mxu0 0
        %407 = vmatpush1.bf16.msra.mxu0 0
        %408 = vmatprep.subr.bf16.mxu0 0
        %409 = vmatpush1.bf16.msra.mxu0 0
        %410 = vmatprep.subr.bf16.mxu0 0
        %411 = vmatpush1.bf16.msra.mxu0 0
        %412 = vmatprep.subr.bf16.mxu0 0
        %413 = vmatpush1.bf16.msra.mxu0 0
        %414 = vmatprep.subr.bf16.mxu0 0
        %415 = vmatpush1.bf16.msra.mxu0 0
        %416 = vmatprep.subr.bf16.mxu0 0
        %417 = vmatpush1.bf16.msra.mxu0 0
        %418 = vmatprep.subr.bf16.mxu0 0
        %419 = vmatpush1.bf16.msra.mxu0 0
        %420 = vmatprep.mubr.bf16.mxu0 0
        %421 = vmatmul.mubr.bf16.gmra.mrb[0].mxu0 %v386
        %v422 = vpop.f32.mrb[0].mxu0
        %v423 = vadd.f32 %v358, %v422
        %v424 = vpop.f32.mrb[0].mxu0
        %v425 = vpop.f32.mrb[0].mxu0
        %v426 = vpop.f32.mrb[0].mxu0
        %427 = vdwg.mxu0
        %v428 = vmax.f32 %v423, 0.0
        %v429 = vpack.c.bf16 %v428, %v428
        %v430 = vld [vmem:[%s5] sm:$0xf]
        %v431 = vld [vmem:[%s5 + $0x4] sm:$0xf]
        %v432 = vld [vmem:[%s5 + $0x8] sm:$0xf]
        %v433 = vld [vmem:[%s5 + $0xc] sm:$0xf]
        %v434 = vld [vmem:[%s5 + $0x10] sm:$0xf]
        %v435 = vld [vmem:[%s5 + $0x14] sm:$0xf]
        %v436 = vld [vmem:[%s5 + $0x18] sm:$0xf]
        %v437 = vld [vmem:[%s5 + $0x1c] sm:$0xf]
        %v438 = vld [vmem:[%s6] sm:$0x1]
        %v440 = vlaneseq
        %v441 = vshrl.u32 %v440, 7
        %v442 = vsub.s32 0, %v441
        %v443 = vrot.slane %v438, %v442
        %v453 = vunpack.c.l.b16 %v430
        %v454 = vunpack.c.l.b16 %v431
        %v455 = vunpack.c.l.b16 %v432
        %v456 = vunpack.c.l.b16 %v433
        %v457 = vunpack.c.l.b16 %v434
        %v458 = vunpack.c.l.b16 %v435
        %v459 = vunpack.c.l.b16 %v436
        %v460 = vunpack.c.l.b16 %v437
        %v461 = vpack.c.b16 %v454, %v453
        %v462 = vpack.c.b16 %v456, %v455
        %v463 = vpack.c.b16 %v458, %v457
        %v464 = vpack.c.b16 %v460, %v459
        %v470 = vsel %vm384, %v429, 0
        %472 = vmatprep.subr.bf16.mxu0 0
        %473 = vmatpush1.bf16.msra.mxu0 %v461
        %474 = vmatprep.subr.bf16.mxu0 0
        %475 = vmatpush1.bf16.msra.mxu0 %v462
        %476 = vmatprep.subr.bf16.mxu0 0
        %477 = vmatpush1.bf16.msra.mxu0 %v463
        %478 = vmatprep.subr.bf16.mxu0 0
        %479 = vmatpush1.bf16.msra.mxu0 %v464
        %480 = vmatprep.subr.bf16.mxu0 0
        %481 = vmatpush1.bf16.msra.mxu0 0
        %482 = vmatprep.subr.bf16.mxu0 0
        %483 = vmatpush1.bf16.msra.mxu0 0
        %484 = vmatprep.subr.bf16.mxu0 0
        %485 = vmatpush1.bf16.msra.mxu0 0
        %486 = vmatprep.subr.bf16.mxu0 0
        %487 = vmatpush1.bf16.msra.mxu0 0
        %488 = vmatprep.subr.bf16.mxu0 0
        %489 = vmatpush1.bf16.msra.mxu0 0
        %490 = vmatprep.subr.bf16.mxu0 0
        %491 = vmatpush1.bf16.msra.mxu0 0
        %492 = vmatprep.subr.bf16.mxu0 0
        %493 = vmatpush1.bf16.msra.mxu0 0
        %494 = vmatprep.subr.bf16.mxu0 0
        %495 = vmatpush1.bf16.msra.mxu0 0
        %496 = vmatprep.subr.bf16.mxu0 0
        %497 = vmatpush1.bf16.msra.mxu0 0
        %498 = vmatprep.subr.bf16.mxu0 0
        %499 = vmatpush1.bf16.msra.mxu0 0
        %500 = vmatprep.subr.bf16.mxu0 0
        %501 = vmatpush1.bf16.msra.mxu0 0
        %502 = vmatprep.subr.bf16.mxu0 0
        %503 = vmatpush1.bf16.msra.mxu0 0
        %504 = vmatprep.mubr.bf16.mxu0 0
        %505 = vmatmul.mubr.bf16.gmra.mrb[0].mxu0 %v470
        %v506 = vpop.f32.mrb[0].mxu0
        %v507 = vadd.f32 %v443, %v506
        %v508 = vpop.f32.mrb[0].mxu0
        %v509 = vpop.f32.mrb[0].mxu0
        %v510 = vpop.f32.mrb[0].mxu0
        %511 = vdwg.mxu0
        %vm512 = vcmask 130048
        %513 = vst.msk [vmem:[%s269] sm:$0xff] %vm512, %v507
        %s514 = sand.u32 %s181, 1
        %s515 = scalar_lea.sflag [#allocation3], %s514
        %s516 = sand.u32 %s181, 1
        %s517 = smul.addr %s516, 8
        %s518 = scalar_lea.vmem [#allocation2], %s517
        // Predicated region
        $region49: #{mlp_forward.1} parent=47 // pred_check
          %p519 = pneg %p191
        $region50: #{mlp_forward.1} parent=47 // pred_check_branch
          %521 = sbr.rel (%p519) target = $region52
        $region51: #{mlp_forward.1} parent=47 // pred_region
          %s523 = ssub.s32 128, 128
          %524 = vsyncadd %s515, %s523
          %s525 = smul.addr %s21, 128
          %s526 = scalar_lea.hbm %s7, %s525
          %s528 = sshll.u32 %s518, 4
          %s529 = int_to_ptr.vmem [resolvable:$true] %s528
          %531 = dma.vmem_to_hbm [thread:$0]  %s529, 128, %s526, %s515
        $region52: #{mlp_forward.1} parent=47 // pred_fallthru
          _
      $region48: #{mlp_forward.1} parent=5 // pred_fallthru
        _
      %p532 = scmp.le.s32.totalorder 2, %s16
      // Predicated region
      $region53: #{mlp_forward.1} parent=5 // pred_check
        %p533 = pneg %p532
      $region54: #{mlp_forward.1} parent=5 // pred_check_branch
        %535 = sbr.rel (%p533) target = $region56
      $region55: #{mlp_forward.1} parent=5 // pred_region
        %s536 = ssub.s32 %s16, 2
        // Predicated region
        $region57: #{mlp_forward.1} parent=55 // pred_check
          %p537 = pneg %p197
        $region58: #{mlp_forward.1} parent=55 // pred_check_branch
          %539 = sbr.rel (%p537) target = $region60
        $region59: #{mlp_forward.1} parent=55 // pred_region
          %s540 = sand.u32 %s182, 1
          %s541 = scalar_lea.sflag [#allocation3], %s540
          %s542 = sand.u32 %s182, 1
          %s543 = smul.addr %s542, 8
          %s544 = scalar_lea.vmem [#allocation2], %s543
          %545 = dma.done %s541, 128
        $region60: #{mlp_forward.1} parent=55 // pred_fallthru
          _
      $region56: #{mlp_forward.1} parent=5 // pred_fallthru
        _
    $region6: #{mlp_forward.1} parent=1 // loop_footer
      %s20 = sadd.s32 1, %s16
    $region7: #{mlp_forward.1} parent=1 // loop_footer_branch
      %15 = sbr.rel target = $region3
    $region8: #{mlp_forward.1} parent=1 // loop_exit
      _
    %546 = vsyncpa [#allocation3], 1
    %s547 = scalar_lea.sflag [#allocation3], 1
    %548 = vsyncpa %s547, 1

</llo_original>
